<compile_context>
chip_gen: v6e
topology: v6e:2x2x1
jax: 0.10.0
libtpu: 0.0.40
codegen_flags: <defaults>
</compile_context>

<pallas_src>
import jax
import jax.numpy as jnp
import numpy as np
from jax import lax
from jax.experimental import pallas as pl
from jax.experimental.pallas import tpu as pltpu


LANE = 128
T_CHUNK = 16                   # timesteps per grid step in the recurrent kernel
ROW_TILE = 256                 # row tile for the parallel matmuls
COL_TILE = 512                 # column tile (vocab / 4H) for the parallel matmuls
VMEM_LIMIT = 48 * 1024 * 1024  # explicit scoped-VMEM budget (safe on v7x 64MiB)

GATE_ORDER = np.array([0, 1, 3, 2])  # PyTorch [i,f,g,o] -> kernel [i,f,o,g]


def _round_up(x, m):
    return (x + m - 1) // m * m


def _pad_to(a, shape):
    pads = [(0, s - d) for d, s in zip(a.shape, shape)]
    if all(p == (0, 0) for p in pads):
        return a
    return jnp.pad(a, pads)


# ----------------------------------------------------------------------------
# Kernel 1: tiled matmul + bias  (used for x·W_ih^T and hiddens·W_out^T)
# Grid order (cols, rows): weight tile stays resident, activation rows stream.
# ----------------------------------------------------------------------------
def _matmul_bias_kernel(x_ref, w_ref, b_ref, o_ref):
    o_ref[...] = (jnp.dot(x_ref[...], w_ref[...],
                          preferred_element_type=jnp.float32)
                  + b_ref[...]).astype(o_ref.dtype)


def _matmul_bias(x, w, b, out_dtype=jnp.float32):
    """x: (R, K) bf16, w: (K, N) bf16, b: (1, N) f32 -> (R, N) out_dtype."""
    R, K = x.shape
    N = w.shape[1]
    return pl.pallas_call(
        _matmul_bias_kernel,
        out_shape=jax.ShapeDtypeStruct((R, N), out_dtype),
        grid_spec=pltpu.PrefetchScalarGridSpec(
            num_scalar_prefetch=0,
            # cols outer, rows inner -> W block index constant over inner axis
            grid=(N // COL_TILE, R // ROW_TILE),
            in_specs=[
                pl.BlockSpec((ROW_TILE, K), lambda j, i: (i, 0)),
                pl.BlockSpec((K, COL_TILE), lambda j, i: (0, j)),
                pl.BlockSpec((1, COL_TILE), lambda j, i: (0, j)),
            ],
            out_specs=pl.BlockSpec((ROW_TILE, COL_TILE), lambda j, i: (i, j)),
        ),
        compiler_params=pltpu.CompilerParams(
            dimension_semantics=("parallel", "parallel"),
            vmem_limit_bytes=VMEM_LIMIT,
        ),
    )(x, w, b)


# ----------------------------------------------------------------------------
# Kernel 2: recurrent LSTM over chunks of timesteps (sequential time axis),
# batch chunks on a parallel leading axis (2 TCs on v7x).
# Consumes precomputed gates_x = x·W_ih^T + b; only h·W_hh^T stays in the loop.
# ----------------------------------------------------------------------------
def _lstm_kernel(gx_ref, whh_ref, hid_ref, h_s, c_s):
    H = h_s.shape[1]

    @pl.when(pl.program_id(1) == 0)
    def _():
        # nn.LSTM default zero initial (h0, c0), once per batch chunk
        h_s[...] = jnp.zeros_like(h_s)
        c_s[...] = jnp.zeros_like(c_s)

    whh = whh_ref[...]                                   # (H, 4H) bf16, invariant

    def step(t, carry):
        h, c = carry                                     # f32 (B_tile, H)
        gates = gx_ref[t] + jnp.dot(h.astype(jnp.bfloat16), whh,
                                    preferred_element_type=jnp.float32)
        # gate order: i, f, o, g -> one sigmoid over 3H, one tanh over H
        sig = jax.nn.sigmoid(gates[:, :3 * H])
        i_g = sig[:, 0 * H:1 * H]
        f_g = sig[:, 1 * H:2 * H]
        o_g = sig[:, 2 * H:3 * H]
        g_g = jnp.tanh(gates[:, 3 * H:4 * H])

        c_new = f_g * c + i_g * g_g                      # gate math kept in f32
        h_new = o_g * jnp.tanh(c_new)
        hid_ref[t] = h_new.astype(hid_ref.dtype)
        return (h_new, c_new)

    h_fin, c_fin = lax.fori_loop(0, hid_ref.shape[0], step,
                                 (h_s[...], c_s[...]), unroll=True)
    h_s[...] = h_fin
    c_s[...] = c_fin


def _lstm_pallas(gates_x, w_hh_t, b_tile, n_b):
    """gates_x: (T_pad, B_p, 4H_p) f32, w_hh_t: (H_p, 4H_p) bf16
       -> hiddens (T_pad, B_p, H_p) bf16."""
    T_pad, B_p, G = gates_x.shape
    H_p = w_hh_t.shape[0]
    n_chunks = T_pad // T_CHUNK

    return pl.pallas_call(
        _lstm_kernel,
        out_shape=jax.ShapeDtypeStruct((T_pad, B_p, H_p), jnp.bfloat16),
        grid_spec=pltpu.PrefetchScalarGridSpec(
            num_scalar_prefetch=0,
            grid=(n_b, n_chunks),
            in_specs=[
                pl.BlockSpec((T_CHUNK, b_tile, G), lambda b, i: (i, b, 0)),
                pl.BlockSpec((H_p, G), lambda b, i: (0, 0),
                             pipeline_mode=pl.Buffered(buffer_count=1)),
            ],
            out_specs=pl.BlockSpec((T_CHUNK, b_tile, H_p), lambda b, i: (i, b, 0)),
            scratch_shapes=[
                pltpu.VMEM((b_tile, H_p), jnp.float32),   # h state
                pltpu.VMEM((b_tile, H_p), jnp.float32),   # c state
            ],
        ),
        compiler_params=pltpu.CompilerParams(
            dimension_semantics=("parallel", "arbitrary"),
            vmem_limit_bytes=VMEM_LIMIT,
        ),
    )(gates_x, w_hh_t)


# ----------------------------------------------------------------------------
# Wrapper mirroring DecoderRNN.forward
# ----------------------------------------------------------------------------
def decoder_rnn_forward(features, captions, params):
    """features: (B, E) f32, captions: (T_cap, B) int32 -> logits (T_cap+1, B, V)."""
    B, E = features.shape
    T = captions.shape[0] + 1
    H = params["w_hh"].shape[1]
    V = params["w_out"].shape[0]

    # hardware-friendly padded sizes
    B_p = _round_up(max(B, 16), 16)        # bf16 packs 16 rows per sublane group
    n_b = 2 if B_p >= 32 else 1            # split batch across 2 TCs when possible
    if n_b == 2:
        B_p = _round_up(B_p, 32)
    b_tile = B_p // n_b
    E_p = _round_up(E, LANE)
    H_p = _round_up(H, LANE)
    V_p = _round_up(V, COL_TILE)
    T_pad = _round_up(T, T_CHUNK)

    # self.embed(captions): gather (glue, stays in JAX)
    emb = jnp.take(params["embedding"], captions, axis=0)            # (T_cap, B, E)
    # TODO(synk): nn.Dropout(0.5) implemented as identity (eval mode); training-mode
    # stochastic dropout is not reproduced here.
    x = jnp.concatenate([features[None].astype(jnp.float32),
                         emb.astype(jnp.float32)], axis=0)           # (T, B, E)
    x = _pad_to(x, (T, B_p, E_p)).astype(jnp.bfloat16)

    # LSTM weights: reorder gates to [i, f, o, g], pad per gate block, bf16 for MXU
    w_ih = params["w_ih"].reshape(4, H, E)[GATE_ORDER]
    w_hh = params["w_hh"].reshape(4, H, H)[GATE_ORDER]
    bias = (params["b_ih"] + params["b_hh"]).reshape(4, H)[GATE_ORDER]
    w_ih_t = _pad_to(w_ih, (4, H_p, E_p)).reshape(4 * H_p, E_p).T.astype(jnp.bfloat16)
    w_hh_t = _pad_to(w_hh, (4, H_p, H_p)).reshape(4 * H_p, H_p).T.astype(jnp.bfloat16)
    b_cat = _pad_to(bias, (4, H_p)).reshape(1, 4 * H_p).astype(jnp.float32)

    # input projection hoisted out of the recurrence: gates_x = x·W_ih^T + b
    rows = T * B_p
    rows_p = _round_up(rows, ROW_TILE)
    x_flat = _pad_to(x.reshape(rows, E_p), (rows_p, E_p))
    gx = _matmul_bias(x_flat, w_ih_t, b_cat, jnp.float32)            # (rows_p, 4H_p)
    gates_x = _pad_to(gx[:rows].reshape(T, B_p, 4 * H_p),
                      (T_pad, B_p, 4 * H_p))                         # pad time only

    # sequential recurrence: only h·W_hh^T + gate math per step
    hiddens = _lstm_pallas(gates_x, w_hh_t, b_tile, n_b)             # (T_pad, B_p, H_p)

    # output projection over the REAL T timesteps only, W_out-resident tiling
    w_out_t = _pad_to(params["w_out"], (V_p, H_p)).T.astype(jnp.bfloat16)
    b_out = _pad_to(params["b_out"], (V_p,)).reshape(1, V_p).astype(jnp.float32)
    h_flat = _pad_to(hiddens[:T].reshape(rows, H_p), (rows_p, H_p))
    logits = _matmul_bias(h_flat, w_out_t, b_out, jnp.float32)       # (rows_p, V_p)
    return logits[:rows].reshape(T, B_p, V_p)[:, :B, :V]


# ----------------------------------------------------------------------------
# Pure-JAX f32 reference (PyTorch eval-mode semantics) for correctness check
# ----------------------------------------------------------------------------
def decoder_rnn_reference(features, captions, params):
    emb = jnp.take(params["embedding"], captions, axis=0)
    x = jnp.concatenate([features[None, :, :], emb], axis=0).astype(jnp.float32)
    _, B, _ = x.shape
    H = params["w_hh"].shape[1]

    w_ih_t = params["w_ih"].T
    w_hh_t = params["w_hh"].T
    b = params["b_ih"] + params["b_hh"]

    def step(carry, x_t):
        h, c = carry
        gates = x_t @ w_ih_t + h @ w_hh_t + b
        i_g = jax.nn.sigmoid(gates[:, 0 * H:1 * H])
        f_g = jax.nn.sigmoid(gates[:, 1 * H:2 * H])
        g_g = jnp.tanh(gates[:, 2 * H:3 * H])
        o_g = jax.nn.sigmoid(gates[:, 3 * H:4 * H])
        c = f_g * c + i_g * g_g
        h = o_g * jnp.tanh(c)
        return (h, c), h

    h0 = jnp.zeros((B, H), jnp.float32)
    c0 = jnp.zeros((B, H), jnp.float32)
    _, hiddens = jax.lax.scan(step, (h0, c0), x)
    return hiddens @ params["w_out"].T + params["b_out"]


# ----------------------------------------------------------------------------
# Deterministic parameter init (shapes per DecoderRNN.__init__)
# ----------------------------------------------------------------------------
def init_params(key, embed_size, hidden_size, vocab_size):
    ks = jax.random.split(key, 7)
    k_lstm = 1.0 / np.sqrt(hidden_size)
    k_lin = 1.0 / np.sqrt(hidden_size)
    return {
        "embedding": jax.random.normal(ks[0], (vocab_size, embed_size), jnp.float32),
        "w_ih": jax.random.uniform(ks[1], (4 * hidden_size, embed_size),
                                   jnp.float32, -k_lstm, k_lstm),
        "w_hh": jax.random.uniform(ks[2], (4 * hidden_size, hidden_size),
                                   jnp.float32, -k_lstm, k_lstm),
        "b_ih": jax.random.uniform(ks[3], (4 * hidden_size,),
                                   jnp.float32, -k_lstm, k_lstm),
        "b_hh": jax.random.uniform(ks[4], (4 * hidden_size,),
                                   jnp.float32, -k_lstm, k_lstm),
        "w_out": jax.random.uniform(ks[5], (vocab_size, hidden_size),
                                    jnp.float32, -k_lin, k_lin),
        "b_out": jax.random.uniform(ks[6], (vocab_size,),
                                    jnp.float32, -k_lin, k_lin),
    }


if __name__ == "__main__":
    embed_size, hidden_size, vocab_size = 16, 32, 64
    batch, seq_len = 2, 8

    key = jax.random.PRNGKey(0)
    kp, kf, kc = jax.random.split(key, 3)

    params = init_params(kp, embed_size, hidden_size, vocab_size)
    features = jax.random.normal(kf, (batch, embed_size), jnp.float32)
    captions = jax.random.randint(kc, (seq_len, batch), 0, vocab_size, jnp.int32)

    out = decoder_rnn_forward(features, captions, params)
    out = jax.block_until_ready(out)

    ref = decoder_rnn_reference(features, captions, params)
    # bf16 MXU operands (f32 accumulation) -> relaxed tolerance vs f32 reference.
    np.testing.assert_allclose(np.asarray(out), np.asarray(ref),
                               rtol=5e-2, atol=5e-2)
    assert out.shape == (seq_len + 1, batch, vocab_size)

    print("KERNEL_OK")
</pallas_src>

<mosaic_0001>
module attributes {stable_mosaic.version = 11 : i64} {
  func.func @_matmul_bias_kernel(%arg0: i32, %arg1: i32, %arg2: memref<256x128xbf16, #tpu.memory_space<vmem>>, %arg3: memref<128x512xbf16, #tpu.memory_space<vmem>>, %arg4: memref<1x512xf32, #tpu.memory_space<vmem>>, %arg5: memref<256x512xf32, #tpu.memory_space<vmem>>) attributes {dimension_semantics = [#tpu.dimension_semantics<parallel>, #tpu.dimension_semantics<parallel>], iteration_bounds = array<i64: 1, 1>, scalar_prefetch = 0 : i64, scratch_operands = 0 : i64, tpu.core_type = #tpu.core_type<tc>, window_params = [{transform_indices = @transform_0, window_bounds = array<i64: 256, 128>}, {transform_indices = @transform_1, window_bounds = array<i64: 128, 512>}, {transform_indices = @transform_2, window_bounds = array<i64: 1, 512>}, {transform_indices = @transform_3, window_bounds = array<i64: 256, 512>}]} {
    %c0 = arith.constant 0 : index
    %c0_0 = arith.constant 0 : index
    %0 = vector.load %arg2[%c0, %c0_0] : memref<256x128xbf16, #tpu.memory_space<vmem>>, vector<256x128xbf16>
    %c0_1 = arith.constant 0 : index
    %c0_2 = arith.constant 0 : index
    %1 = vector.load %arg3[%c0_1, %c0_2] : memref<128x512xbf16, #tpu.memory_space<vmem>>, vector<128x512xbf16>
    %cst = arith.constant dense<0.000000e+00> : vector<256x512xf32>
    %2 = tpu.matmul %0, %1, %cst {dimension_numbers = #tpu.dot_dimension_numbers<[1], [0], [0], [1], [0, 0, 1, 1], [], []>} : vector<256x128xbf16>, vector<128x512xbf16>, vector<256x512xf32> -> vector<256x512xf32>
    %c0_3 = arith.constant 0 : index
    %c0_4 = arith.constant 0 : index
    %3 = vector.load %arg4[%c0_3, %c0_4] : memref<1x512xf32, #tpu.memory_space<vmem>>, vector<1x512xf32>
    %4 = vector.broadcast %3 : vector<1x512xf32> to vector<256x512xf32>
    %5 = arith.addf %2, %4 : vector<256x512xf32>
    %c0_5 = arith.constant 0 : index
    %c0_6 = arith.constant 0 : index
    %6 = vector.load %arg5[%c0_5, %c0_6] : memref<256x512xf32, #tpu.memory_space<vmem>>, vector<256x512xf32>
    tpu.vector_store %arg5[%c0_5, %c0_6], %5 {strides = array<i32>} : memref<256x512xf32, #tpu.memory_space<vmem>>, vector<256x512xf32>,
    return
  }
  func.func @transform_0(%arg0: i32, %arg1: i32) -> (i32, i32) {
    %c0_i32 = arith.constant 0 : i32
    %c0_i32_0 = arith.constant 0 : i32
    return %arg1, %c0_i32 : i32, i32
  }
  func.func @transform_1(%arg0: i32, %arg1: i32) -> (i32, i32) {
    %c0_i32 = arith.constant 0 : i32
    %c0_i32_0 = arith.constant 0 : i32
    return %c0_i32, %arg0 : i32, i32
  }
  func.func @transform_2(%arg0: i32, %arg1: i32) -> (i32, i32) {
    %c0_i32 = arith.constant 0 : i32
    %c0_i32_0 = arith.constant 0 : i32
    return %c0_i32, %arg0 : i32, i32
  }
  func.func @transform_3(%arg0: i32, %arg1: i32) -> (i32, i32) {
    %c0_i32 = arith.constant 0 : i32
    return %arg1, %arg0 : i32, i32
  }
}

</mosaic_0001>

<llo_original>
// kernel: tpu_custom_call.1
$region0: #{tpu_custom_call.1}
  #allocation0 [shape = 'u32[]', space=smem, size = 0x4, offset = 0x4, fixed_abs, tag = 'smem constant byte address 0x4 - core index']
  #allocation1 [shape = 'u32[144,128]{1,0:T(1,128)}', space=vmem, size = 0x12000, scoped, tag = 'internal scratch']
  %s0 = inlined_call_operand.hbm [shape: bf16[256,128], index: 0, kind: input, shape index: {}]
  %s1 = inlined_call_operand.hbm [shape: bf16[128,512], index: 1, kind: input, shape index: {}]
  %s2 = inlined_call_operand.hbm [shape: f32[1,512], index: 2, kind: input, shape index: {}]
  %s3 = inlined_call_operand.hbm [shape: f32[256,512], index: 3, kind: output, shape index: {}]
  %s4 = sld [smem:[#allocation0]]
  $region34: #{tpu_custom_call.1} parent=0
    _
  %s6 = ssub.s32 1, %s4
  %s7 = scalar_select 0, %s6, %s4
  $region1: #{tpu_custom_call.1} parent=0
    #allocation2 [shape = 'u8[65536]{0}', space=vmem, size = 0x10000, scoped, tag = 'input window, operand 0, single buffered']
    #allocation3 [shape = 's32[1]{0}', space=sflag, size = 0x4, scoped, tag = 'scoped memory for tpu_custom_call.1']
    #allocation4 [shape = 's32[1]{0}', space=sflag, size = 0x4, scoped, tag = 'scoped memory for tpu_custom_call.1']
    #allocation5 [shape = 'u8[131072]{0}', space=vmem, size = 0x20000, scoped, tag = 'input window, operand 1, single buffered']
    #allocation6 [shape = 's32[1]{0}', space=sflag, size = 0x4, scoped, tag = 'scoped memory for tpu_custom_call.1']
    #allocation7 [shape = 'u8[2048]{0}', space=vmem, size = 0x800, scoped, tag = 'input window, operand 2, single buffered']
    #allocation8 [shape = 'u8[524288]{0}', space=vmem, size = 0x80000, scoped, tag = 'output window, operand 0, single buffered']
    %8 = vsyncpa [#allocation3], 0
    %9 = vsyncpa [#allocation6], 0
    %10 = vsyncpa [#allocation4], 0
    // Predicated region
    $region2: #{tpu_custom_call.1} parent=1 // pred_check
      _
    $region3: #{tpu_custom_call.1} parent=1 // pred_check_branch
      %12 = sbr.rel (0) target = $region5
    $region4: #{tpu_custom_call.1} parent=1 // pred_region
      %s14 = ssub.s32 2048, 2048
      %15 = vsyncadd [#allocation3], %s14
      %s16 = sshll.u32 [#allocation2], 4
      %s17 = int_to_ptr.vmem [resolvable:$true] %s16
      %22 = dma.hbm_to_vmem [thread:$0]  %s0, 2048, %s17, [#allocation3], 64, 64, 4
    $region5: #{tpu_custom_call.1} parent=1 // pred_fallthru
      _
    // Predicated region
    $region6: #{tpu_custom_call.1} parent=1 // pred_check
      _
    $region7: #{tpu_custom_call.1} parent=1 // pred_check_branch
      %24 = sbr.rel (0) target = $region9
    $region8: #{tpu_custom_call.1} parent=1 // pred_region
      %s26 = ssub.s32 4096, 4096
      %27 = vsyncadd [#allocation6], %s26
      %s28 = sshll.u32 [#allocation5], 4
      %s29 = int_to_ptr.vmem [resolvable:$true] %s28
      %34 = dma.hbm_to_vmem [thread:$0]  %s1, 4096, %s29, [#allocation6], 256, 256, 16
    $region9: #{tpu_custom_call.1} parent=1 // pred_fallthru
      _
    // Predicated region
    $region10: #{tpu_custom_call.1} parent=1 // pred_check
      _
    $region11: #{tpu_custom_call.1} parent=1 // pred_check_branch
      %36 = sbr.rel (0) target = $region13
    $region12: #{tpu_custom_call.1} parent=1 // pred_region
      %s38 = ssub.s32 64, 64
      %39 = vsyncadd [#allocation6], %s38
      %s41 = sshll.u32 [#allocation7], 4
      %s42 = int_to_ptr.vmem [resolvable:$true] %s41
      %44 = dma.hbm_to_vmem [thread:$0]  %s2, 64, %s42, [#allocation6]
    $region13: #{tpu_custom_call.1} parent=1 // pred_fallthru
      _
    // Predicated region
    $region14: #{tpu_custom_call.1} parent=1 // pred_check
      _
    $region15: #{tpu_custom_call.1} parent=1 // pred_check_branch
      %46 = sbr.rel (0) target = $region17
    $region16: #{tpu_custom_call.1} parent=1 // pred_region
      %47 = dma.done [#allocation3], 2048
    $region17: #{tpu_custom_call.1} parent=1 // pred_fallthru
      _
    // Predicated region
    $region18: #{tpu_custom_call.1} parent=1 // pred_check
      _
    $region19: #{tpu_custom_call.1} parent=1 // pred_check_branch
      %49 = sbr.rel (0) target = $region21
    $region20: #{tpu_custom_call.1} parent=1 // pred_region
      %50 = dma.done [#allocation6], 4096
    $region21: #{tpu_custom_call.1} parent=1 // pred_fallthru
      _
    // Predicated region
    $region22: #{tpu_custom_call.1} parent=1 // pred_check
      _
    $region23: #{tpu_custom_call.1} parent=1 // pred_check_branch
      %52 = sbr.rel (0) target = $region25
    $region24: #{tpu_custom_call.1} parent=1 // pred_region
      %53 = dma.done [#allocation6], 64
    $region25: #{tpu_custom_call.1} parent=1 // pred_fallthru
      _
    %v55 = vld [vmem:[#allocation2] sm:$0xf]
    %v56 = vld [vmem:[#allocation2 + $0x4] sm:$0xf]
    %v57 = vld [vmem:[#allocation2 + $0x8] sm:$0xf]
    %v58 = vld [vmem:[#allocation2 + $0xc] sm:$0xf]
    %v59 = vld [vmem:[#allocation2 + $0x10] sm:$0xf]
    %v60 = vld [vmem:[#allocation2 + $0x14] sm:$0xf]
    %v61 = vld [vmem:[#allocation2 + $0x18] sm:$0xf]
    %v62 = vld [vmem:[#allocation2 + $0x1c] sm:$0xf]
    %v63 = vld [vmem:[#allocation2 + $0x20] sm:$0xf]
    %v64 = vld [vmem:[#allocation2 + $0x24] sm:$0xf]
    %v65 = vld [vmem:[#allocation2 + $0x28] sm:$0xf]
    %v66 = vld [vmem:[#allocation2 + $0x2c] sm:$0xf]
    %v67 = vld [vmem:[#allocation2 + $0x30] sm:$0xf]
    %v68 = vld [vmem:[#allocation2 + $0x34] sm:$0xf]
    %v69 = vld [vmem:[#allocation2 + $0x38] sm:$0xf]
    %v70 = vld [vmem:[#allocation2 + $0x3c] sm:$0xf]
    %v71 = vld [vmem:[#allocation2 + $0x40] sm:$0xf]
    %v72 = vld [vmem:[#allocation2 + $0x44] sm:$0xf]
    %v73 = vld [vmem:[#allocation2 + $0x48] sm:$0xf]
    %v74 = vld [vmem:[#allocation2 + $0x4c] sm:$0xf]
    %v75 = vld [vmem:[#allocation2 + $0x50] sm:$0xf]
    %v76 = vld [vmem:[#allocation2 + $0x54] sm:$0xf]
    %v77 = vld [vmem:[#allocation2 + $0x58] sm:$0xf]
    %v78 = vld [vmem:[#allocation2 + $0x5c] sm:$0xf]
    %v79 = vld [vmem:[#allocation2 + $0x60] sm:$0xf]
    %v80 = vld [vmem:[#allocation2 + $0x64] sm:$0xf]
    %v81 = vld [vmem:[#allocation2 + $0x68] sm:$0xf]
    %v82 = vld [vmem:[#allocation2 + $0x6c] sm:$0xf]
    %v83 = vld [vmem:[#allocation2 + $0x70] sm:$0xf]
    %v84 = vld [vmem:[#allocation2 + $0x74] sm:$0xf]
    %v85 = vld [vmem:[#allocation2 + $0x78] sm:$0xf]
    %v86 = vld [vmem:[#allocation2 + $0x7c] sm:$0xf]
    %v87 = vld [vmem:[#allocation5] sm:$0xff]
    %v88 = vld [vmem:[#allocation5 + $0x8] sm:$0xff]
    %v89 = vld [vmem:[#allocation5 + $0x10] sm:$0xff]
    %v90 = vld [vmem:[#allocation5 + $0x18] sm:$0xff]
    %v91 = vld [vmem:[#allocation5 + $0x20] sm:$0xff]
    %v92 = vld [vmem:[#allocation5 + $0x28] sm:$0xff]
    %v93 = vld [vmem:[#allocation5 + $0x30] sm:$0xff]
    %v94 = vld [vmem:[#allocation5 + $0x38] sm:$0xff]
    %v95 = vld [vmem:[#allocation5 + $0x40] sm:$0xff]
    %v96 = vld [vmem:[#allocation5 + $0x48] sm:$0xff]
    %v97 = vld [vmem:[#allocation5 + $0x50] sm:$0xff]
    %v98 = vld [vmem:[#allocation5 + $0x58] sm:$0xff]
    %v99 = vld [vmem:[#allocation5 + $0x60] sm:$0xff]
    %v100 = vld [vmem:[#allocation5 + $0x68] sm:$0xff]
    %v101 = vld [vmem:[#allocation5 + $0x70] sm:$0xff]
    %v102 = vld [vmem:[#allocation5 + $0x78] sm:$0xff]
    %v103 = vld [vmem:[#allocation5 + $0x80] sm:$0xff]
    %v104 = vld [vmem:[#allocation5 + $0x88] sm:$0xff]
    %v105 = vld [vmem:[#allocation5 + $0x90] sm:$0xff]
    %v106 = vld [vmem:[#allocation5 + $0x98] sm:$0xff]
    %v107 = vld [vmem:[#allocation5 + $0xa0] sm:$0xff]
    %v108 = vld [vmem:[#allocation5 + $0xa8] sm:$0xff]
    %v109 = vld [vmem:[#allocation5 + $0xb0] sm:$0xff]
    %v110 = vld [vmem:[#allocation5 + $0xb8] sm:$0xff]
    %v111 = vld [vmem:[#allocation5 + $0xc0] sm:$0xff]
    %v112 = vld [vmem:[#allocation5 + $0xc8] sm:$0xff]
    %v113 = vld [vmem:[#allocation5 + $0xd0] sm:$0xff]
    %v114 = vld [vmem:[#allocation5 + $0xd8] sm:$0xff]
    %v115 = vld [vmem:[#allocation5 + $0xe0] sm:$0xff]
    %v116 = vld [vmem:[#allocation5 + $0xe8] sm:$0xff]
    %v117 = vld [vmem:[#allocation5 + $0xf0] sm:$0xff]
    %v118 = vld [vmem:[#allocation5 + $0xf8] sm:$0xff]
    %v119 = vld [vmem:[#allocation7] sm:$0xf]
    %v121 = vlaneseq
    %v122 = vshrl.u32 %v121, 7
    %v123 = vsub.s32 0, %v122
    %v124 = vrot.slane %v119, %v123
    %v125 = vlaneseq
    %v126 = vshrl.u32 %v125, 7
    %v127 = vsub.s32 1, %v126
    %v128 = vrot.slane %v119, %v127
    %v129 = vlaneseq
    %v130 = vshrl.u32 %v129, 7
    %v131 = vsub.s32 2, %v130
    %v132 = vrot.slane %v119, %v131
    %v133 = vlaneseq
    %v134 = vshrl.u32 %v133, 7
    %v135 = vsub.s32 3, %v134
    %v136 = vrot.slane %v119, %v135
    %v173 = vunpack.c.l.b16 %v55
    %v174 = vunpack.c.l.b16 %v56
    %v175 = vunpack.c.l.b16 %v57
    %v176 = vunpack.c.l.b16 %v58
    %v177 = vunpack.c.l.b16 %v59
    %v178 = vunpack.c.l.b16 %v60
    %v179 = vunpack.c.l.b16 %v61
    %v180 = vunpack.c.l.b16 %v62
    %v181 = vunpack.c.l.b16 %v63
    %v182 = vunpack.c.l.b16 %v64
    %v183 = vunpack.c.l.b16 %v65
    %v184 = vunpack.c.l.b16 %v66
    %v185 = vunpack.c.l.b16 %v67
    %v186 = vunpack.c.l.b16 %v68
    %v187 = vunpack.c.l.b16 %v69
    %v188 = vunpack.c.l.b16 %v70
    %v189 = vunpack.c.l.b16 %v71
    %v190 = vunpack.c.l.b16 %v72
    %v191 = vunpack.c.l.b16 %v73
    %v192 = vunpack.c.l.b16 %v74
    %v193 = vunpack.c.l.b16 %v75
    %v194 = vunpack.c.l.b16 %v76
    %v195 = vunpack.c.l.b16 %v77
    %v196 = vunpack.c.l.b16 %v78
    %v197 = vunpack.c.l.b16 %v79
    %v198 = vunpack.c.l.b16 %v80
    %v199 = vunpack.c.l.b16 %v81
    %v200 = vunpack.c.l.b16 %v82
    %v201 = vunpack.c.l.b16 %v83
    %v202 = vunpack.c.l.b16 %v84
    %v203 = vunpack.c.l.b16 %v85
    %v204 = vunpack.c.l.b16 %v86
    %v205 = vpack.c.b16 %v174, %v173
    %v206 = vpack.c.b16 %v176, %v175
    %v207 = vpack.c.b16 %v178, %v177
    %v208 = vpack.c.b16 %v180, %v179
    %v209 = vpack.c.b16 %v182, %v181
    %v210 = vpack.c.b16 %v184, %v183
    %v211 = vpack.c.b16 %v186, %v185
    %v212 = vpack.c.b16 %v188, %v187
    %v213 = vpack.c.b16 %v190, %v189
    %v214 = vpack.c.b16 %v192, %v191
    %v215 = vpack.c.b16 %v194, %v193
    %v216 = vpack.c.b16 %v196, %v195
    %v217 = vpack.c.b16 %v198, %v197
    %v218 = vpack.c.b16 %v200, %v199
    %v219 = vpack.c.b16 %v202, %v201
    %v220 = vpack.c.b16 %v204, %v203
    %v269 = vunpack.c.l.b16 %v87
    %v270 = vunpack.c.h.b16 %v87
    %v271 = vunpack.c.l.b16 %v88
    %v272 = vunpack.c.h.b16 %v88
    %v273 = vunpack.c.l.b16 %v89
    %v274 = vunpack.c.h.b16 %v89
    %v275 = vunpack.c.l.b16 %v90
    %v276 = vunpack.c.h.b16 %v90
    %v277 = vunpack.c.l.b16 %v91
    %v278 = vunpack.c.h.b16 %v91
    %v279 = vunpack.c.l.b16 %v92
    %v280 = vunpack.c.h.b16 %v92
    %v281 = vunpack.c.l.b16 %v93
    %v282 = vunpack.c.h.b16 %v93
    %v283 = vunpack.c.l.b16 %v94
    %v284 = vunpack.c.h.b16 %v94
    %v285 = vunpack.c.l.b16 %v95
    %v286 = vunpack.c.h.b16 %v95
    %v287 = vunpack.c.l.b16 %v96
    %v288 = vunpack.c.h.b16 %v96
    %v289 = vunpack.c.l.b16 %v97
    %v290 = vunpack.c.h.b16 %v97
    %v291 = vunpack.c.l.b16 %v98
    %v292 = vunpack.c.h.b16 %v98
    %v293 = vunpack.c.l.b16 %v99
    %v294 = vunpack.c.h.b16 %v99
    %v295 = vunpack.c.l.b16 %v100
    %v296 = vunpack.c.h.b16 %v100
    %v297 = vunpack.c.l.b16 %v101
    %v298 = vunpack.c.h.b16 %v101
    %v299 = vunpack.c.l.b16 %v102
    %v300 = vunpack.c.h.b16 %v102
    %v301 = vunpack.c.l.b16 %v103
    %v302 = vunpack.c.h.b16 %v103
    %v303 = vunpack.c.l.b16 %v104
    %v304 = vunpack.c.h.b16 %v104
    %v305 = vunpack.c.l.b16 %v105
    %v306 = vunpack.c.h.b16 %v105
    %v307 = vunpack.c.l.b16 %v106
    %v308 = vunpack.c.h.b16 %v106
    %v309 = vunpack.c.l.b16 %v107
    %v310 = vunpack.c.h.b16 %v107
    %v311 = vunpack.c.l.b16 %v108
    %v312 = vunpack.c.h.b16 %v108
    %v313 = vunpack.c.l.b16 %v109
    %v314 = vunpack.c.h.b16 %v109
    %v315 = vunpack.c.l.b16 %v110
    %v316 = vunpack.c.h.b16 %v110
    %v317 = vunpack.c.l.b16 %v111
    %v318 = vunpack.c.h.b16 %v111
    %v319 = vunpack.c.l.b16 %v112
    %v320 = vunpack.c.h.b16 %v112
    %v321 = vunpack.c.l.b16 %v113
    %v322 = vunpack.c.h.b16 %v113
    %v323 = vunpack.c.l.b16 %v114
    %v324 = vunpack.c.h.b16 %v114
    %v325 = vunpack.c.l.b16 %v115
    %v326 = vunpack.c.h.b16 %v115
    %v327 = vunpack.c.l.b16 %v116
    %v328 = vunpack.c.h.b16 %v116
    %v329 = vunpack.c.l.b16 %v117
    %v330 = vunpack.c.h.b16 %v117
    %v331 = vunpack.c.l.b16 %v118
    %v332 = vunpack.c.h.b16 %v118
    %v333 = vpack.c.b16 %v273, %v269
    %v334 = vpack.c.b16 %v274, %v270
    %v335 = vpack.c.b16 %v275, %v271
    %v336 = vpack.c.b16 %v276, %v272
    %v337 = vpack.c.b16 %v281, %v277
    %v338 = vpack.c.b16 %v282, %v278
    %v339 = vpack.c.b16 %v283, %v279
    %v340 = vpack.c.b16 %v284, %v280
    %v341 = vpack.c.b16 %v289, %v285
    %v342 = vpack.c.b16 %v290, %v286
    %v343 = vpack.c.b16 %v291, %v287
    %v344 = vpack.c.b16 %v292, %v288
    %v345 = vpack.c.b16 %v297, %v293
    %v346 = vpack.c.b16 %v298, %v294
    %v347 = vpack.c.b16 %v299, %v295
    %v348 = vpack.c.b16 %v300, %v296
    %v349 = vpack.c.b16 %v305, %v301
    %v350 = vpack.c.b16 %v306, %v302
    %v351 = vpack.c.b16 %v307, %v303
    %v352 = vpack.c.b16 %v308, %v304
    %v353 = vpack.c.b16 %v313, %v309
    %v354 = vpack.c.b16 %v314, %v310
    %v355 = vpack.c.b16 %v315, %v311
    %v356 = vpack.c.b16 %v316, %v312
    %v357 = vpack.c.b16 %v321, %v317
    %v358 = vpack.c.b16 %v322, %v318
    %v359 = vpack.c.b16 %v323, %v319
    %v360 = vpack.c.b16 %v324, %v320
    %v361 = vpack.c.b16 %v329, %v325
    %v362 = vpack.c.b16 %v330, %v326
    %v363 = vpack.c.b16 %v331, %v327
    %v364 = vpack.c.b16 %v332, %v328
    %397 = vmatprep.subr.bf16.mxu0 %v362
    %398 = vmatpush1.bf16.msra.mxu0 %v361
    %399 = vmatprep.subr.bf16.mxu0 %v358
    %400 = vmatpush1.bf16.msra.mxu0 %v357
    %401 = vmatprep.subr.bf16.mxu0 %v354
    %402 = vmatpush1.bf16.msra.mxu0 %v353
    %403 = vmatprep.subr.bf16.mxu0 %v350
    %404 = vmatpush1.bf16.msra.mxu0 %v349
    %405 = vmatprep.subr.bf16.mxu0 %v346
    %406 = vmatpush1.bf16.msra.mxu0 %v345
    %407 = vmatprep.subr.bf16.mxu0 %v342
    %408 = vmatpush1.bf16.msra.mxu0 %v341
    %409 = vmatprep.subr.bf16.mxu0 %v338
    %410 = vmatpush1.bf16.msra.mxu0 %v337
    %411 = vmatprep.subr.bf16.mxu0 %v334
    %412 = vmatpush1.bf16.msra.mxu0 %v333
    %413 = vmatprep.subr.bf16.mxu0 0
    %414 = vmatpush2.bf16.msra.mxu0 0
    %415 = vmatprep.subr.bf16.mxu0 0
    %416 = vmatpush2.bf16.msra.mxu0 0
    %417 = vmatprep.subr.bf16.mxu0 0
    %418 = vmatpush2.bf16.msra.mxu0 0
    %419 = vmatprep.subr.bf16.mxu0 0
    %420 = vmatpush2.bf16.msra.mxu0 0
    %421 = vmatprep.subr.bf16.mxu0 0
    %422 = vmatpush2.bf16.msra.mxu0 0
    %423 = vmatprep.subr.bf16.mxu0 0
    %424 = vmatpush2.bf16.msra.mxu0 0
    %425 = vmatprep.subr.bf16.mxu0 0
    %426 = vmatpush2.bf16.msra.mxu0 0
    %427 = vmatprep.subr.bf16.mxu0 0
    %428 = vmatpush2.bf16.msra.mxu0 0
    %429 = vmatprep.mubr.bf16.mxu0 0
    %430 = vmatmul.mubr.bf16.gmra.mxu0 %v205
    %v431 = vpop.f32.mrf.mxu0
    %v432 = vadd.f32 %v124, %v431
    %v433 = vpop.f32.mrf.mxu0
    %v434 = vadd.f32 %v128, %v433
    %v435 = vpop.f32.mrf.mxu0
    %v436 = vadd.f32 %v124, %v435
    %v437 = vpop.f32.mrf.mxu0
    %v438 = vadd.f32 %v128, %v437
    %439 = vmatprep.mubr.bf16.mxu0 0
    %440 = vmatmul.mubr.bf16.gmra.mxu0 %v206
    %v441 = vpop.f32.mrf.mxu0
    %v442 = vadd.f32 %v124, %v441
    %v443 = vpop.f32.mrf.mxu0
    %v444 = vadd.f32 %v128, %v443
    %v445 = vpop.f32.mrf.mxu0
    %v446 = vadd.f32 %v124, %v445
    %v447 = vpop.f32.mrf.mxu0
    %v448 = vadd.f32 %v128, %v447
    %449 = vmatprep.mubr.bf16.mxu0 0
    %450 = vmatmul.mubr.bf16.gmra.mxu0 %v207
    %v451 = vpop.f32.mrf.mxu0
    %v452 = vadd.f32 %v124, %v451
    %v453 = vpop.f32.mrf.mxu0
    %v454 = vadd.f32 %v128, %v453
    %v455 = vpop.f32.mrf.mxu0
    %v456 = vadd.f32 %v124, %v455
    %v457 = vpop.f32.mrf.mxu0
    %v458 = vadd.f32 %v128, %v457
    %459 = vmatprep.mubr.bf16.mxu0 0
    %460 = vmatmul.mubr.bf16.gmra.mxu0 %v208
    %v461 = vpop.f32.mrf.mxu0
    %v462 = vadd.f32 %v124, %v461
    %v463 = vpop.f32.mrf.mxu0
    %v464 = vadd.f32 %v128, %v463
    %v465 = vpop.f32.mrf.mxu0
    %v466 = vadd.f32 %v124, %v465
    %v467 = vpop.f32.mrf.mxu0
    %v468 = vadd.f32 %v128, %v467
    %469 = vmatprep.mubr.bf16.mxu0 0
    %470 = vmatmul.mubr.bf16.gmra.mxu0 %v209
    %v471 = vpop.f32.mrf.mxu0
    %v472 = vadd.f32 %v124, %v471
    %v473 = vpop.f32.mrf.mxu0
    %v474 = vadd.f32 %v128, %v473
    %v475 = vpop.f32.mrf.mxu0
    %v476 = vadd.f32 %v124, %v475
    %v477 = vpop.f32.mrf.mxu0
    %v478 = vadd.f32 %v128, %v477
    %479 = vmatprep.mubr.bf16.mxu0 0
    %480 = vmatmul.mubr.bf16.gmra.mxu0 %v210
    %v481 = vpop.f32.mrf.mxu0
    %v482 = vadd.f32 %v124, %v481
    %v483 = vpop.f32.mrf.mxu0
    %v484 = vadd.f32 %v128, %v483
    %v485 = vpop.f32.mrf.mxu0
    %v486 = vadd.f32 %v124, %v485
    %v487 = vpop.f32.mrf.mxu0
    %v488 = vadd.f32 %v128, %v487
    %489 = vmatprep.mubr.bf16.mxu0 0
    %490 = vmatmul.mubr.bf16.gmra.mxu0 %v211
    %v491 = vpop.f32.mrf.mxu0
    %v492 = vadd.f32 %v124, %v491
    %v493 = vpop.f32.mrf.mxu0
    %v494 = vadd.f32 %v128, %v493
    %v495 = vpop.f32.mrf.mxu0
    %v496 = vadd.f32 %v124, %v495
    %v497 = vpop.f32.mrf.mxu0
    %v498 = vadd.f32 %v128, %v497
    %499 = vmatprep.mubr.bf16.mxu0 0
    %500 = vmatmul.mubr.bf16.gmra.mxu0 %v212
    %v501 = vpop.f32.mrf.mxu0
    %v502 = vadd.f32 %v124, %v501
    %v503 = vpop.f32.mrf.mxu0
    %v504 = vadd.f32 %v128, %v503
    %v505 = vpop.f32.mrf.mxu0
    %v506 = vadd.f32 %v124, %v505
    %v507 = vpop.f32.mrf.mxu0
    %v508 = vadd.f32 %v128, %v507
    %509 = vmatprep.mubr.bf16.mxu0 0
    %510 = vmatmul.mubr.bf16.gmra.mxu0 %v213
    %v511 = vpop.f32.mrf.mxu0
    %v512 = vadd.f32 %v124, %v511
    %v513 = vpop.f32.mrf.mxu0
    %v514 = vadd.f32 %v128, %v513
    %v515 = vpop.f32.mrf.mxu0
    %v516 = vadd.f32 %v124, %v515
    %v517 = vpop.f32.mrf.mxu0
    %v518 = vadd.f32 %v128, %v517
    %519 = vmatprep.mubr.bf16.mxu0 0
    %520 = vmatmul.mubr.bf16.gmra.mxu0 %v214
    %v521 = vpop.f32.mrf.mxu0
    %v522 = vadd.f32 %v124, %v521
    %v523 = vpop.f32.mrf.mxu0
    %v524 = vadd.f32 %v128, %v523
    %v525 = vpop.f32.mrf.mxu0
    %v526 = vadd.f32 %v124, %v525
    %v527 = vpop.f32.mrf.mxu0
    %v528 = vadd.f32 %v128, %v527
    %529 = vmatprep.mubr.bf16.mxu0 0
    %530 = vmatmul.mubr.bf16.gmra.mxu0 %v215
    %v531 = vpop.f32.mrf.mxu0
    %v532 = vadd.f32 %v124, %v531
    %v533 = vpop.f32.mrf.mxu0
    %v534 = vadd.f32 %v128, %v533
    %v535 = vpop.f32.mrf.mxu0
    %v536 = vadd.f32 %v124, %v535
    %v537 = vpop.f32.mrf.mxu0
    %v538 = vadd.f32 %v128, %v537
    %539 = vmatprep.mubr.bf16.mxu0 0
    %540 = vmatmul.mubr.bf16.gmra.mxu0 %v216
    %v541 = vpop.f32.mrf.mxu0
    %v542 = vadd.f32 %v124, %v541
    %v543 = vpop.f32.mrf.mxu0
    %v544 = vadd.f32 %v128, %v543
    %v545 = vpop.f32.mrf.mxu0
    %v546 = vadd.f32 %v124, %v545
    %v547 = vpop.f32.mrf.mxu0
    %v548 = vadd.f32 %v128, %v547
    %549 = vmatprep.mubr.bf16.mxu0 0
    %550 = vmatmul.mubr.bf16.gmra.mxu0 %v217
    %v551 = vpop.f32.mrf.mxu0
    %v552 = vadd.f32 %v124, %v551
    %v553 = vpop.f32.mrf.mxu0
    %v554 = vadd.f32 %v128, %v553
    %v555 = vpop.f32.mrf.mxu0
    %v556 = vadd.f32 %v124, %v555
    %v557 = vpop.f32.mrf.mxu0
    %v558 = vadd.f32 %v128, %v557
    %559 = vmatprep.mubr.bf16.mxu0 0
    %560 = vmatmul.mubr.bf16.gmra.mxu0 %v218
    %v561 = vpop.f32.mrf.mxu0
    %v562 = vadd.f32 %v124, %v561
    %v563 = vpop.f32.mrf.mxu0
    %v564 = vadd.f32 %v128, %v563
    %v565 = vpop.f32.mrf.mxu0
    %v566 = vadd.f32 %v124, %v565
    %v567 = vpop.f32.mrf.mxu0
    %v568 = vadd.f32 %v128, %v567
    %569 = vmatprep.mubr.bf16.mxu0 0
    %570 = vmatmul.mubr.bf16.gmra.mxu0 %v219
    %v571 = vpop.f32.mrf.mxu0
    %v572 = vadd.f32 %v124, %v571
    %v573 = vpop.f32.mrf.mxu0
    %v574 = vadd.f32 %v128, %v573
    %v575 = vpop.f32.mrf.mxu0
    %v576 = vadd.f32 %v124, %v575
    %v577 = vpop.f32.mrf.mxu0
    %v578 = vadd.f32 %v128, %v577
    %579 = vmatprep.mubr.bf16.mxu0 0
    %580 = vmatmul.mubr.bf16.gmra.mxu0 %v220
    %v581 = vpop.f32.mrf.mxu0
    %v582 = vadd.f32 %v124, %v581
    %v583 = vpop.f32.mrf.mxu0
    %v584 = vadd.f32 %v128, %v583
    %v585 = vpop.f32.mrf.mxu0
    %v586 = vadd.f32 %v124, %v585
    %v587 = vpop.f32.mrf.mxu0
    %v588 = vadd.f32 %v128, %v587
    %589 = vdwg.mxu0
    %590 = vmatprep.subr.bf16.mxu0 %v364
    %591 = vmatpush1.bf16.msra.mxu0 %v363
    %592 = vmatprep.subr.bf16.mxu0 %v360
    %593 = vmatpush1.bf16.msra.mxu0 %v359
    %594 = vmatprep.subr.bf16.mxu0 %v356
    %595 = vmatpush1.bf16.msra.mxu0 %v355
    %596 = vmatprep.subr.bf16.mxu0 %v352
    %597 = vmatpush1.bf16.msra.mxu0 %v351
    %598 = vmatprep.subr.bf16.mxu0 %v348
    %599 = vmatpush1.bf16.msra.mxu0 %v347
    %600 = vmatprep.subr.bf16.mxu0 %v344
    %601 = vmatpush1.bf16.msra.mxu0 %v343
    %602 = vmatprep.subr.bf16.mxu0 %v340
    %603 = vmatpush1.bf16.msra.mxu0 %v339
    %604 = vmatprep.subr.bf16.mxu0 %v336
    %605 = vmatpush1.bf16.msra.mxu0 %v335
    %606 = vmatprep.subr.bf16.mxu0 0
    %607 = vmatpush2.bf16.msra.mxu0 0
    %608 = vmatprep.subr.bf16.mxu0 0
    %609 = vmatpush2.bf16.msra.mxu0 0
    %610 = vmatprep.subr.bf16.mxu0 0
    %611 = vmatpush2.bf16.msra.mxu0 0
    %612 = vmatprep.subr.bf16.mxu0 0
    %613 = vmatpush2.bf16.msra.mxu0 0
    %614 = vmatprep.subr.bf16.mxu0 0
    %615 = vmatpush2.bf16.msra.mxu0 0
    %616 = vmatprep.subr.bf16.mxu0 0
    %617 = vmatpush2.bf16.msra.mxu0 0
    %618 = vmatprep.subr.bf16.mxu0 0
    %619 = vmatpush2.bf16.msra.mxu0 0
    %620 = vmatprep.subr.bf16.mxu0 0
    %621 = vmatpush2.bf16.msra.mxu0 0
    %622 = vmatprep.mubr.bf16.mxu0 0
    %623 = vmatmul.mubr.bf16.gmra.mxu0 %v205
    %v624 = vpop.f32.mrf.mxu0
    %v625 = vadd.f32 %v132, %v624
    %v626 = vpop.f32.mrf.mxu0
    %v627 = vadd.f32 %v136, %v626
    %v628 = vpop.f32.mrf.mxu0
    %v629 = vadd.f32 %v132, %v628
    %v630 = vpop.f32.mrf.mxu0
    %v631 = vadd.f32 %v136, %v630
    %632 = vmatprep.mubr.bf16.mxu0 0
    %633 = vmatmul.mubr.bf16.gmra.mxu0 %v206
    %v634 = vpop.f32.mrf.mxu0
    %v635 = vadd.f32 %v132, %v634
    %v636 = vpop.f32.mrf.mxu0
    %v637 = vadd.f32 %v136, %v636
    %v638 = vpop.f32.mrf.mxu0
    %v639 = vadd.f32 %v132, %v638
    %v640 = vpop.f32.mrf.mxu0
    %v641 = vadd.f32 %v136, %v640
    %642 = vmatprep.mubr.bf16.mxu0 0
    %643 = vmatmul.mubr.bf16.gmra.mxu0 %v207
    %v644 = vpop.f32.mrf.mxu0
    %v645 = vadd.f32 %v132, %v644
    %v646 = vpop.f32.mrf.mxu0
    %v647 = vadd.f32 %v136, %v646
    %v648 = vpop.f32.mrf.mxu0
    %v649 = vadd.f32 %v132, %v648
    %v650 = vpop.f32.mrf.mxu0
    %v651 = vadd.f32 %v136, %v650
    %652 = vmatprep.mubr.bf16.mxu0 0
    %653 = vmatmul.mubr.bf16.gmra.mxu0 %v208
    %v654 = vpop.f32.mrf.mxu0
    %v655 = vadd.f32 %v132, %v654
    %v656 = vpop.f32.mrf.mxu0
    %v657 = vadd.f32 %v136, %v656
    %v658 = vpop.f32.mrf.mxu0
    %v659 = vadd.f32 %v132, %v658
    %v660 = vpop.f32.mrf.mxu0
    %v661 = vadd.f32 %v136, %v660
    %662 = vmatprep.mubr.bf16.mxu0 0
    %663 = vmatmul.mubr.bf16.gmra.mxu0 %v209
    %v664 = vpop.f32.mrf.mxu0
    %v665 = vadd.f32 %v132, %v664
    %v666 = vpop.f32.mrf.mxu0
    %v667 = vadd.f32 %v136, %v666
    %v668 = vpop.f32.mrf.mxu0
    %v669 = vadd.f32 %v132, %v668
    %v670 = vpop.f32.mrf.mxu0
    %v671 = vadd.f32 %v136, %v670
    %672 = vmatprep.mubr.bf16.mxu0 0
    %673 = vmatmul.mubr.bf16.gmra.mxu0 %v210
    %v674 = vpop.f32.mrf.mxu0
    %v675 = vadd.f32 %v132, %v674
    %v676 = vpop.f32.mrf.mxu0
    %v677 = vadd.f32 %v136, %v676
    %v678 = vpop.f32.mrf.mxu0
    %v679 = vadd.f32 %v132, %v678
    %v680 = vpop.f32.mrf.mxu0
    %v681 = vadd.f32 %v136, %v680
    %682 = vmatprep.mubr.bf16.mxu0 0
    %683 = vmatmul.mubr.bf16.gmra.mxu0 %v211
    %v684 = vpop.f32.mrf.mxu0
    %v685 = vadd.f32 %v132, %v684
    %v686 = vpop.f32.mrf.mxu0
    %v687 = vadd.f32 %v136, %v686
    %v688 = vpop.f32.mrf.mxu0
    %v689 = vadd.f32 %v132, %v688
    %v690 = vpop.f32.mrf.mxu0
    %v691 = vadd.f32 %v136, %v690
    %692 = vmatprep.mubr.bf16.mxu0 0
    %693 = vmatmul.mubr.bf16.gmra.mxu0 %v212
    %v694 = vpop.f32.mrf.mxu0
    %v695 = vadd.f32 %v132, %v694
    %v696 = vpop.f32.mrf.mxu0
    %v697 = vadd.f32 %v136, %v696
    %v698 = vpop.f32.mrf.mxu0
    %v699 = vadd.f32 %v132, %v698
    %v700 = vpop.f32.mrf.mxu0
    %v701 = vadd.f32 %v136, %v700
    %702 = vmatprep.mubr.bf16.mxu0 0
    %703 = vmatmul.mubr.bf16.gmra.mxu0 %v213
    %v704 = vpop.f32.mrf.mxu0
    %v705 = vadd.f32 %v132, %v704
    %v706 = vpop.f32.mrf.mxu0
    %v707 = vadd.f32 %v136, %v706
    %v708 = vpop.f32.mrf.mxu0
    %v709 = vadd.f32 %v132, %v708
    %v710 = vpop.f32.mrf.mxu0
    %v711 = vadd.f32 %v136, %v710
    %712 = vmatprep.mubr.bf16.mxu0 0
    %713 = vmatmul.mubr.bf16.gmra.mxu0 %v214
    %v714 = vpop.f32.mrf.mxu0
    %v715 = vadd.f32 %v132, %v714
    %v716 = vpop.f32.mrf.mxu0
    %v717 = vadd.f32 %v136, %v716
    %v718 = vpop.f32.mrf.mxu0
    %v719 = vadd.f32 %v132, %v718
    %v720 = vpop.f32.mrf.mxu0
    %v721 = vadd.f32 %v136, %v720
    %722 = vmatprep.mubr.bf16.mxu0 0
    %723 = vmatmul.mubr.bf16.gmra.mxu0 %v215
    %v724 = vpop.f32.mrf.mxu0
    %v725 = vadd.f32 %v132, %v724
    %v726 = vpop.f32.mrf.mxu0
    %v727 = vadd.f32 %v136, %v726
    %v728 = vpop.f32.mrf.mxu0
    %v729 = vadd.f32 %v132, %v728
    %v730 = vpop.f32.mrf.mxu0
    %v731 = vadd.f32 %v136, %v730
    %732 = vmatprep.mubr.bf16.mxu0 0
    %733 = vmatmul.mubr.bf16.gmra.mxu0 %v216
    %v734 = vpop.f32.mrf.mxu0
    %v735 = vadd.f32 %v132, %v734
    %v736 = vpop.f32.mrf.mxu0
    %v737 = vadd.f32 %v136, %v736
    %v738 = vpop.f32.mrf.mxu0
    %v739 = vadd.f32 %v132, %v738
    %v740 = vpop.f32.mrf.mxu0
    %v741 = vadd.f32 %v136, %v740
    %742 = vmatprep.mubr.bf16.mxu0 0
    %743 = vmatmul.mubr.bf16.gmra.mxu0 %v217
    %v744 = vpop.f32.mrf.mxu0
    %v745 = vadd.f32 %v132, %v744
    %v746 = vpop.f32.mrf.mxu0
    %v747 = vadd.f32 %v136, %v746
    %v748 = vpop.f32.mrf.mxu0
    %v749 = vadd.f32 %v132, %v748
    %v750 = vpop.f32.mrf.mxu0
    %v751 = vadd.f32 %v136, %v750
    %752 = vmatprep.mubr.bf16.mxu0 0
    %753 = vmatmul.mubr.bf16.gmra.mxu0 %v218
    %v754 = vpop.f32.mrf.mxu0
    %v755 = vadd.f32 %v132, %v754
    %v756 = vpop.f32.mrf.mxu0
    %v757 = vadd.f32 %v136, %v756
    %v758 = vpop.f32.mrf.mxu0
    %v759 = vadd.f32 %v132, %v758
    %v760 = vpop.f32.mrf.mxu0
    %v761 = vadd.f32 %v136, %v760
    %762 = vmatprep.mubr.bf16.mxu0 0
    %763 = vmatmul.mubr.bf16.gmra.mxu0 %v219
    %v764 = vpop.f32.mrf.mxu0
    %v765 = vadd.f32 %v132, %v764
    %v766 = vpop.f32.mrf.mxu0
    %v767 = vadd.f32 %v136, %v766
    %v768 = vpop.f32.mrf.mxu0
    %v769 = vadd.f32 %v132, %v768
    %v770 = vpop.f32.mrf.mxu0
    %v771 = vadd.f32 %v136, %v770
    %772 = vmatprep.mubr.bf16.mxu0 0
    %773 = vmatmul.mubr.bf16.gmra.mxu0 %v220
    %v774 = vpop.f32.mrf.mxu0
    %v775 = vadd.f32 %v132, %v774
    %v776 = vpop.f32.mrf.mxu0
    %v777 = vadd.f32 %v136, %v776
    %v778 = vpop.f32.mrf.mxu0
    %v779 = vadd.f32 %v132, %v778
    %v780 = vpop.f32.mrf.mxu0
    %v781 = vadd.f32 %v136, %v780
    %782 = vdwg.mxu0
    %783 = vst [vmem:[#allocation8] sm:$0xff] %v432
    %784 = vst [vmem:[#allocation8 + $0x8] sm:$0xff] %v434
    %785 = vst [vmem:[#allocation8 + $0x10] sm:$0xff] %v625
    %786 = vst [vmem:[#allocation8 + $0x18] sm:$0xff] %v627
    %787 = vst [vmem:[#allocation8 + $0x20] sm:$0xff] %v436
    %788 = vst [vmem:[#allocation8 + $0x28] sm:$0xff] %v438
    %789 = vst [vmem:[#allocation8 + $0x30] sm:$0xff] %v629
    %790 = vst [vmem:[#allocation8 + $0x38] sm:$0xff] %v631
    %791 = vst [vmem:[#allocation8 + $0x40] sm:$0xff] %v442
    %792 = vst [vmem:[#allocation8 + $0x48] sm:$0xff] %v444
    %793 = vst [vmem:[#allocation8 + $0x50] sm:$0xff] %v635
    %794 = vst [vmem:[#allocation8 + $0x58] sm:$0xff] %v637
    %795 = vst [vmem:[#allocation8 + $0x60] sm:$0xff] %v446
    %796 = vst [vmem:[#allocation8 + $0x68] sm:$0xff] %v448
    %797 = vst [vmem:[#allocation8 + $0x70] sm:$0xff] %v639
    %798 = vst [vmem:[#allocation8 + $0x78] sm:$0xff] %v641
    %799 = vst [vmem:[#allocation8 + $0x80] sm:$0xff] %v452
    %800 = vst [vmem:[#allocation8 + $0x88] sm:$0xff] %v454
    %801 = vst [vmem:[#allocation8 + $0x90] sm:$0xff] %v645
    %802 = vst [vmem:[#allocation8 + $0x98] sm:$0xff] %v647
    %803 = vst [vmem:[#allocation8 + $0xa0] sm:$0xff] %v456
    %804 = vst [vmem:[#allocation8 + $0xa8] sm:$0xff] %v458
    %805 = vst [vmem:[#allocation8 + $0xb0] sm:$0xff] %v649
    %806 = vst [vmem:[#allocation8 + $0xb8] sm:$0xff] %v651
    %807 = vst [vmem:[#allocation8 + $0xc0] sm:$0xff] %v462
    %808 = vst [vmem:[#allocation8 + $0xc8] sm:$0xff] %v464
    %809 = vst [vmem:[#allocation8 + $0xd0] sm:$0xff] %v655
    %810 = vst [vmem:[#allocation8 + $0xd8] sm:$0xff] %v657
    %811 = vst [vmem:[#allocation8 + $0xe0] sm:$0xff] %v466
    %812 = vst [vmem:[#allocation8 + $0xe8] sm:$0xff] %v468
    %813 = vst [vmem:[#allocation8 + $0xf0] sm:$0xff] %v659
    %814 = vst [vmem:[#allocation8 + $0xf8] sm:$0xff] %v661
    %815 = vst [vmem:[#allocation8 + $0x100] sm:$0xff] %v472
    %816 = vst [vmem:[#allocation8 + $0x108] sm:$0xff] %v474
    %817 = vst [vmem:[#allocation8 + $0x110] sm:$0xff] %v665
    %818 = vst [vmem:[#allocation8 + $0x118] sm:$0xff] %v667
    %819 = vst [vmem:[#allocation8 + $0x120] sm:$0xff] %v476
    %820 = vst [vmem:[#allocation8 + $0x128] sm:$0xff] %v478
    %821 = vst [vmem:[#allocation8 + $0x130] sm:$0xff] %v669
    %822 = vst [vmem:[#allocation8 + $0x138] sm:$0xff] %v671
    %823 = vst [vmem:[#allocation8 + $0x140] sm:$0xff] %v482
    %824 = vst [vmem:[#allocation8 + $0x148] sm:$0xff] %v484
    %825 = vst [vmem:[#allocation8 + $0x150] sm:$0xff] %v675
    %826 = vst [vmem:[#allocation8 + $0x158] sm:$0xff] %v677
    %827 = vst [vmem:[#allocation8 + $0x160] sm:$0xff] %v486
    %828 = vst [vmem:[#allocation8 + $0x168] sm:$0xff] %v488
    %829 = vst [vmem:[#allocation8 + $0x170] sm:$0xff] %v679
    %830 = vst [vmem:[#allocation8 + $0x178] sm:$0xff] %v681
    %831 = vst [vmem:[#allocation8 + $0x180] sm:$0xff] %v492
    %832 = vst [vmem:[#allocation8 + $0x188] sm:$0xff] %v494
    %833 = vst [vmem:[#allocation8 + $0x190] sm:$0xff] %v685
    %834 = vst [vmem:[#allocation8 + $0x198] sm:$0xff] %v687
    %835 = vst [vmem:[#allocation8 + $0x1a0] sm:$0xff] %v496
    %836 = vst [vmem:[#allocation8 + $0x1a8] sm:$0xff] %v498
    %837 = vst [vmem:[#allocation8 + $0x1b0] sm:$0xff] %v689
    %838 = vst [vmem:[#allocation8 + $0x1b8] sm:$0xff] %v691
    %839 = vst [vmem:[#allocation8 + $0x1c0] sm:$0xff] %v502
    %840 = vst [vmem:[#allocation8 + $0x1c8] sm:$0xff] %v504
    %841 = vst [vmem:[#allocation8 + $0x1d0] sm:$0xff] %v695
    %842 = vst [vmem:[#allocation8 + $0x1d8] sm:$0xff] %v697
    %843 = vst [vmem:[#allocation8 + $0x1e0] sm:$0xff] %v506
    %844 = vst [vmem:[#allocation8 + $0x1e8] sm:$0xff] %v508
    %845 = vst [vmem:[#allocation8 + $0x1f0] sm:$0xff] %v699
    %846 = vst [vmem:[#allocation8 + $0x1f8] sm:$0xff] %v701
    %847 = vst [vmem:[#allocation8 + $0x200] sm:$0xff] %v512
    %848 = vst [vmem:[#allocation8 + $0x208] sm:$0xff] %v514
    %849 = vst [vmem:[#allocation8 + $0x210] sm:$0xff] %v705
    %850 = vst [vmem:[#allocation8 + $0x218] sm:$0xff] %v707
    %851 = vst [vmem:[#allocation8 + $0x220] sm:$0xff] %v516
    %852 = vst [vmem:[#allocation8 + $0x228] sm:$0xff] %v518
    %853 = vst [vmem:[#allocation8 + $0x230] sm:$0xff] %v709
    %854 = vst [vmem:[#allocation8 + $0x238] sm:$0xff] %v711
    %855 = vst [vmem:[#allocation8 + $0x240] sm:$0xff] %v522
    %856 = vst [vmem:[#allocation8 + $0x248] sm:$0xff] %v524
    %857 = vst [vmem:[#allocation8 + $0x250] sm:$0xff] %v715
    %858 = vst [vmem:[#allocation8 + $0x258] sm:$0xff] %v717
    %859 = vst [vmem:[#allocation8 + $0x260] sm:$0xff] %v526
    %860 = vst [vmem:[#allocation8 + $0x268] sm:$0xff] %v528
    %861 = vst [vmem:[#allocation8 + $0x270] sm:$0xff] %v719
    %862 = vst [vmem:[#allocation8 + $0x278] sm:$0xff] %v721
    %863 = vst [vmem:[#allocation8 + $0x280] sm:$0xff] %v532
    %864 = vst [vmem:[#allocation8 + $0x288] sm:$0xff] %v534
    %865 = vst [vmem:[#allocation8 + $0x290] sm:$0xff] %v725
    %866 = vst [vmem:[#allocation8 + $0x298] sm:$0xff] %v727
    %867 = vst [vmem:[#allocation8 + $0x2a0] sm:$0xff] %v536
    %868 = vst [vmem:[#allocation8 + $0x2a8] sm:$0xff] %v538
    %869 = vst [vmem:[#allocation8 + $0x2b0] sm:$0xff] %v729
    %870 = vst [vmem:[#allocation8 + $0x2b8] sm:$0xff] %v731
    %871 = vst [vmem:[#allocation8 + $0x2c0] sm:$0xff] %v542
    %872 = vst [vmem:[#allocation8 + $0x2c8] sm:$0xff] %v544
    %873 = vst [vmem:[#allocation8 + $0x2d0] sm:$0xff] %v735
    %874 = vst [vmem:[#allocation8 + $0x2d8] sm:$0xff] %v737
    %875 = vst [vmem:[#allocation8 + $0x2e0] sm:$0xff] %v546
    %876 = vst [vmem:[#allocation8 + $0x2e8] sm:$0xff] %v548
    %877 = vst [vmem:[#allocation8 + $0x2f0] sm:$0xff] %v739
    %878 = vst [vmem:[#allocation8 + $0x2f8] sm:$0xff] %v741
    %879 = vst [vmem:[#allocation8 + $0x300] sm:$0xff] %v552
    %880 = vst [vmem:[#allocation8 + $0x308] sm:$0xff] %v554
    %881 = vst [vmem:[#allocation8 + $0x310] sm:$0xff] %v745
    %882 = vst [vmem:[#allocation8 + $0x318] sm:$0xff] %v747
    %883 = vst [vmem:[#allocation8 + $0x320] sm:$0xff] %v556
    %884 = vst [vmem:[#allocation8 + $0x328] sm:$0xff] %v558
    %885 = vst [vmem:[#allocation8 + $0x330] sm:$0xff] %v749
    %886 = vst [vmem:[#allocation8 + $0x338] sm:$0xff] %v751
    %887 = vst [vmem:[#allocation8 + $0x340] sm:$0xff] %v562
    %888 = vst [vmem:[#allocation8 + $0x348] sm:$0xff] %v564
    %889 = vst [vmem:[#allocation8 + $0x350] sm:$0xff] %v755
    %890 = vst [vmem:[#allocation8 + $0x358] sm:$0xff] %v757
    %891 = vst [vmem:[#allocation8 + $0x360] sm:$0xff] %v566
    %892 = vst [vmem:[#allocation8 + $0x368] sm:$0xff] %v568
    %893 = vst [vmem:[#allocation8 + $0x370] sm:$0xff] %v759
    %894 = vst [vmem:[#allocation8 + $0x378] sm:$0xff] %v761
    %895 = vst [vmem:[#allocation8 + $0x380] sm:$0xff] %v572
    %896 = vst [vmem:[#allocation8 + $0x388] sm:$0xff] %v574
    %897 = vst [vmem:[#allocation8 + $0x390] sm:$0xff] %v765
    %898 = vst [vmem:[#allocation8 + $0x398] sm:$0xff] %v767
    %899 = vst [vmem:[#allocation8 + $0x3a0] sm:$0xff] %v576
    %900 = vst [vmem:[#allocation8 + $0x3a8] sm:$0xff] %v578
    %901 = vst [vmem:[#allocation8 + $0x3b0] sm:$0xff] %v769
    %902 = vst [vmem:[#allocation8 + $0x3b8] sm:$0xff] %v771
    %903 = vst [vmem:[#allocation8 + $0x3c0] sm:$0xff] %v582
    %904 = vst [vmem:[#allocation8 + $0x3c8] sm:$0xff] %v584
    %905 = vst [vmem:[#allocation8 + $0x3d0] sm:$0xff] %v775
    %906 = vst [vmem:[#allocation8 + $0x3d8] sm:$0xff] %v777
    %907 = vst [vmem:[#allocation8 + $0x3e0] sm:$0xff] %v586
    %908 = vst [vmem:[#allocation8 + $0x3e8] sm:$0xff] %v588
    %909 = vst [vmem:[#allocation8 + $0x3f0] sm:$0xff] %v779
    %910 = vst [vmem:[#allocation8 + $0x3f8] sm:$0xff] %v781
    // Predicated region
    $region26: #{tpu_custom_call.1} parent=1 // pred_check
      _
    $region27: #{tpu_custom_call.1} parent=1 // pred_check_branch
      %912 = sbr.rel (0) target = $region29
    $region28: #{tpu_custom_call.1} parent=1 // pred_region
      %s914 = ssub.s32 16384, 16384
      %915 = vsyncadd [#allocation4], %s914
      %s916 = sshll.u32 [#allocation8], 4
      %s917 = int_to_ptr.vmem [resolvable:$true] %s916
      %922 = dma.vmem_to_hbm [thread:$0]  %s917, 16384, %s3, [#allocation4], 512, 512, 32
    $region29: #{tpu_custom_call.1} parent=1 // pred_fallthru
      _
    // Predicated region
    $region30: #{tpu_custom_call.1} parent=1 // pred_check
      _
    $region31: #{tpu_custom_call.1} parent=1 // pred_check_branch
      %924 = sbr.rel (0) target = $region33
    $region32: #{tpu_custom_call.1} parent=1 // pred_region
      %925 = dma.done [#allocation4], 16384
    $region33: #{tpu_custom_call.1} parent=1 // pred_fallthru
      _
    %926 = vsyncpa [#allocation3], 1
    %927 = vsyncpa [#allocation6], 1
    %928 = vsyncpa [#allocation4], 1

</llo_original>
